<compile_context>
chip_gen: v5e
topology: v5e:2x2
jax: 0.10.0
libtpu: 0.0.40
codegen_flags: <defaults>
</compile_context>

<pallas_src>
import jax
import jax.numpy as jnp
from jax import lax
from jax.experimental import pallas as pl
from jax.experimental.pallas import tpu as pltpu


def _dynamics_back_kernel(x_ref, w_ref, b_ref, o_ref):
    # x_ref : (TM, F_in)     lane-packed row tile of activations
    # w_ref : (F_out, F_in)  (block-diagonal) weight in PyTorch (out, in) layout
    # b_ref : (1, F_out)     (tiled) bias, kept 2-D for TPU layout friendliness
    # o_ref : (TM, F_out)
    x = x_ref[...]
    w = w_ref[...]
    bias = b_ref[...]

    # y = x @ W^T + bias : contract x's feature axis with W's in_features axis
    # directly on the MXU (no wrapper-side transpose).
    y = lax.dot_general(
        x, w,
        dimension_numbers=(((1,), (1,)), ((), ())),
        preferred_element_type=jnp.float32,
    ) + bias

    # leaky_relu(slope=0.01) == max(y, 0.01*y) for slope in (0, 1).
    y = jnp.maximum(y, 0.01 * y)
    o_ref[...] = y.astype(o_ref.dtype)


def _pick_row_tile(n_rows, row_bytes, vmem_budget=16 * 1024 * 1024):
    """Row tile (in packed rows).

    Cap: largest multiple of 8 such that the double-buffered x + out tiles
    (2 buffers * 2 arrays * tm * row_bytes) fit in `vmem_budget` (16 MiB --
    well inside the 32 MiB scoped default on v7x and tiny on v5e/v6e's
    128 MiB VMEM).  Within the cap, pick the smallest EVEN grid-step count
    (>= 2) so both v7x TensorCores get balanced work; on v5e/v6e this is just
    a big tile that amortizes the ~0.35 us per-step pipeline overhead.
    """
    n_rows = max(int(n_rows), 1)
    cap = vmem_budget // (4 * row_bytes)
    cap = max((cap // 8) * 8, 8)

    if n_rows <= 8:
        # Too small to split at sublane granularity; single full-extent block.
        return n_rows

    k = 2
    while True:
        tm = -(-n_rows // k)          # cdiv(n_rows, k)
        tm = -(-tm // 8) * 8          # round up to a multiple of 8
        if tm <= cap:
            return max(tm, 8)
        k += 2


def nonlinear_dynamics_back(x, weight, bias):
    """x: (N, b) float32; weight: (b, b) in PyTorch (out, in) layout; bias: (b,)."""
    n, b_in = x.shape
    b_out, _ = weight.shape

    # Lane packing: concatenate `pack` consecutive rows into one 128-wide row
    # and use a block-diagonal weight, so vregs / DMAs / stores are lane-dense.
    pack = 128 // b_in if (b_in < 128 and 128 % b_in == 0 and b_out == b_in) else 1

    if pack > 1:
        n_pad = pack * pl.cdiv(n, pack)
        x_p = x if n_pad == n else jnp.pad(x, ((0, n_pad - n), (0, 0)))
        x_p = x_p.reshape(n_pad // pack, pack * b_in)          # row-major concat
        w_p = jnp.kron(jnp.eye(pack, dtype=weight.dtype), weight)  # block-diag
        bias_p = jnp.tile(bias, (pack,)).reshape(1, pack * b_out)
    else:
        n_pad = n
        x_p = x
        w_p = weight
        bias_p = bias.reshape(1, b_out)

    n_rows, feat_in = x_p.shape
    feat_out = w_p.shape[0]

    row_bytes = max(feat_in, feat_out) * jnp.dtype(x.dtype).itemsize
    tm = _pick_row_tile(n_rows, row_bytes)
    grid = (pl.cdiv(n_rows, tm),)

    out_p = pl.pallas_call(
        _dynamics_back_kernel,
        out_shape=jax.ShapeDtypeStruct((n_rows, feat_out), x.dtype),
        grid_spec=pl.GridSpec(
            grid=grid,
            in_specs=[
                # row-tiled, lane-packed activations: new tile each step (pipelined)
                pl.BlockSpec((tm, feat_in), lambda i: (i, 0)),
                # weight + bias: same block every step -> VMEM-resident
                pl.BlockSpec((feat_out, feat_in), lambda i: (0, 0)),
                pl.BlockSpec((1, feat_out), lambda i: (0, 0)),
            ],
            out_specs=pl.BlockSpec((tm, feat_out), lambda i: (i, 0)),
        ),
        compiler_params=pltpu.CompilerParams(
            # Row tiles are independent: shard across both TensorCores on v7x;
            # neutral on v5e/v6e (single TC).
            dimension_semantics=("parallel",),
        ),
    )(x_p, w_p, bias_p)

    if pack > 1:
        return out_p.reshape(n_pad, b_out)[:n]
    return out_p


def _reference(x, weight, bias):
    y = x @ weight.T + bias
    return jnp.where(y >= 0.0, y, 0.01 * y)


if __name__ == "__main__":
    key = jax.random.PRNGKey(0)
    k_x, k_w, k_b = jax.random.split(key, 3)

    b = 32          # feature dim of the Linear(b, b)
    batch = 8       # number of rows

    x = jax.random.normal(k_x, (batch, b), dtype=jnp.float32)
    # Deterministic param init (mimics nn.Linear uniform(-1/sqrt(b), 1/sqrt(b)))
    bound = 1.0 / jnp.sqrt(jnp.float32(b))
    weight = jax.random.uniform(k_w, (b, b), jnp.float32, -bound, bound)
    bias = jax.random.uniform(k_b, (b,), jnp.float32, -bound, bound)

    out = jax.block_until_ready(nonlinear_dynamics_back(x, weight, bias))
    ref = _reference(x, weight, bias)
    assert out.shape == (batch, b)
    assert jnp.allclose(out, ref, atol=1e-5, rtol=1e-5), "mismatch vs reference"

    # N not a multiple of the pack factor: exercises wrapper padding + slicing.
    x_odd = jax.random.normal(k_x, (37, b), dtype=jnp.float32)
    out_odd = jax.block_until_ready(nonlinear_dynamics_back(x_odd, weight, bias))
    ref_odd = _reference(x_odd, weight, bias)
    assert out_odd.shape == (37, b)
    assert jnp.allclose(out_odd, ref_odd, atol=1e-5, rtol=1e-5), "mismatch (padded)"

    # Larger N: exercises the multi-step (>=2, even) tiled grid path.
    x_big = jax.random.normal(k_x, (2048 + 24, b), dtype=jnp.float32)
    out_big = jax.block_until_ready(nonlinear_dynamics_back(x_big, weight, bias))
    ref_big = _reference(x_big, weight, bias)
    assert jnp.allclose(out_big, ref_big, atol=1e-5, rtol=1e-5), "mismatch (tiled)"

    print("KERNEL_OK")
</pallas_src>

<mosaic_0001>
module attributes {stable_mosaic.version = 11 : i64} {
  func.func @_dynamics_back_kernel(%arg0: i32, %arg1: memref<2x128xf32, #tpu.memory_space<vmem>>, %arg2: memref<128x128xf32, #tpu.memory_space<vmem>>, %arg3: memref<1x128xf32, #tpu.memory_space<vmem>>, %arg4: memref<2x128xf32, #tpu.memory_space<vmem>>) attributes {dimension_semantics = [#tpu.dimension_semantics<parallel>], iteration_bounds = array<i64: 1>, scalar_prefetch = 0 : i64, scratch_operands = 0 : i64, tpu.core_type = #tpu.core_type<tc>, window_params = [{transform_indices = @transform_0, window_bounds = array<i64: 2, 128>}, {pipeline_mode = #tpu.pipeline_mode<synchronous>, transform_indices = @transform_1, window_bounds = array<i64: 128, 128>}, {pipeline_mode = #tpu.pipeline_mode<synchronous>, transform_indices = @transform_2, window_bounds = array<i64: 1, 128>}, {transform_indices = @transform_3, window_bounds = array<i64: 2, 128>}]} {
    %c0 = arith.constant 0 : index
    %c0_0 = arith.constant 0 : index
    %0 = vector.load %arg1[%c0, %c0_0] : memref<2x128xf32, #tpu.memory_space<vmem>>, vector<2x128xf32>
    %c0_1 = arith.constant 0 : index
    %c0_2 = arith.constant 0 : index
    %1 = vector.load %arg2[%c0_1, %c0_2] : memref<128x128xf32, #tpu.memory_space<vmem>>, vector<128x128xf32>
    %c0_3 = arith.constant 0 : index
    %c0_4 = arith.constant 0 : index
    %2 = vector.load %arg3[%c0_3, %c0_4] : memref<1x128xf32, #tpu.memory_space<vmem>>, vector<1x128xf32>
    %cst = arith.constant dense<0.000000e+00> : vector<2x128xf32>
    %3 = tpu.matmul %0, %1, %cst {dimension_numbers = #tpu.dot_dimension_numbers<[1], [1], [0], [0], [0, 0, 1, 0], [], []>} : vector<2x128xf32>, vector<128x128xf32>, vector<2x128xf32> -> vector<2x128xf32>
    %4 = vector.broadcast %2 : vector<1x128xf32> to vector<2x128xf32>
    %5 = arith.addf %3, %4 : vector<2x128xf32>
    %cst_5 = arith.constant 0.00999999977 : f32
    %6 = vector.broadcast %cst_5 : f32 to vector<2x128xf32>
    %7 = arith.mulf %6, %5 : vector<2x128xf32>
    %8 = arith.maximumf %5, %7 : vector<2x128xf32>
    %c0_6 = arith.constant 0 : index
    %c0_7 = arith.constant 0 : index
    %9 = vector.load %arg4[%c0_6, %c0_7] : memref<2x128xf32, #tpu.memory_space<vmem>>, vector<2x128xf32>
    tpu.vector_store %arg4[%c0_6, %c0_7], %8 {strides = array<i32>} : memref<2x128xf32, #tpu.memory_space<vmem>>, vector<2x128xf32>,
    return
  }
  func.func @transform_0(%arg0: i32) -> (i32, i32) {
    %c0_i32 = arith.constant 0 : i32
    %c0_i32_0 = arith.constant 0 : i32
    return %arg0, %c0_i32 : i32, i32
  }
  func.func @transform_1(%arg0: i32) -> (i32, i32) {
    %c0_i32 = arith.constant 0 : i32
    %c0_i32_0 = arith.constant 0 : i32
    %c0_i32_1 = arith.constant 0 : i32
    return %c0_i32, %c0_i32_0 : i32, i32
  }
  func.func @transform_2(%arg0: i32) -> (i32, i32) {
    %c0_i32 = arith.constant 0 : i32
    %c0_i32_0 = arith.constant 0 : i32
    %c0_i32_1 = arith.constant 0 : i32
    return %c0_i32, %c0_i32_0 : i32, i32
  }
  func.func @transform_3(%arg0: i32) -> (i32, i32) {
    %c0_i32 = arith.constant 0 : i32
    %c0_i32_0 = arith.constant 0 : i32
    return %arg0, %c0_i32 : i32, i32
  }
}

</mosaic_0001>

<llo_original>
// kernel: tpu_custom_call.1
$region0: #{tpu_custom_call.1}
  #allocation0 [shape = 'u32[]', space=smem, size = 0x4, offset = 0x4, fixed_abs, tag = 'smem constant byte address 0x4 - core index']
  #allocation1 [shape = 'u32[72,128]{1,0:T(1,128)}', space=vmem, size = 0x9000, scoped, tag = 'internal scratch']
  %s0 = inlined_call_operand.hbm [shape: f32[2,128], index: 0, kind: input, shape index: {}]
  %s1 = inlined_call_operand.hbm [shape: f32[128,128], index: 1, kind: input, shape index: {}]
  %s2 = inlined_call_operand.vmem [shape: f32[1,128], index: 2, kind: input, shape index: {}]
  %s3 = inlined_call_operand.hbm [shape: f32[2,128], index: 3, kind: output, shape index: {}]
  %s4 = sld [smem:[#allocation0]]
  $region30: #{tpu_custom_call.1} parent=0
    _
  %s6 = ssub.s32 1, %s4
  %s7 = scalar_select 0, %s6, %s4
  $region1: #{tpu_custom_call.1} parent=0
    #allocation2 [shape = 'u8[1024]{0}', space=vmem, size = 0x400, scoped, tag = 'input window, operand 0, single buffered']
    #allocation3 [shape = 's32[1]{0}', space=sflag, size = 0x4, scoped, tag = 'scoped memory for tpu_custom_call.1']
    #allocation4 [shape = 's32[1]{0}', space=sflag, size = 0x4, scoped, tag = 'scoped memory for tpu_custom_call.1']
    #allocation5 [shape = 'u8[65536]{0}', space=vmem, size = 0x10000, scoped, tag = 'input window, operand 1, single buffered']
    #allocation6 [shape = 's32[1]{0}', space=sflag, size = 0x4, scoped, tag = 'scoped memory for tpu_custom_call.1']
    #allocation7 [shape = 'u8[1024]{0}', space=vmem, size = 0x400, scoped, tag = 'output window, operand 0, single buffered']
    %8 = vsyncpa [#allocation3], 0
    %9 = vsyncpa [#allocation6], 0
    %10 = vsyncpa [#allocation4], 0
    // Predicated region
    $region2: #{tpu_custom_call.1} parent=1 // pred_check
      _
    $region3: #{tpu_custom_call.1} parent=1 // pred_check_branch
      %12 = sbr.rel (0) target = $region5
    $region4: #{tpu_custom_call.1} parent=1 // pred_region
      %14 = vsyncadd [#allocation3], 0
      %s16 = sshll.u32 %s0, 4
      %s17 = int_to_ptr.hbm [resolvable:$true] %s16
      %s18 = sshll.u32 [#allocation2], 4
      %s19 = int_to_ptr.vmem [resolvable:$true] %s18
      %21 = dma.hbm_to_vmem [thread:$0]  %s17, 32, %s19, [#allocation3]
    $region5: #{tpu_custom_call.1} parent=1 // pred_fallthru
      _
    // Predicated region
    $region6: #{tpu_custom_call.1} parent=1 // pred_check
      _
    $region7: #{tpu_custom_call.1} parent=1 // pred_check_branch
      %23 = sbr.rel (0) target = $region9
    $region8: #{tpu_custom_call.1} parent=1 // pred_region
      %25 = vsyncadd [#allocation6], 0
      %s26 = sshll.u32 %s1, 4
      %s27 = int_to_ptr.hbm [resolvable:$true] %s26
      %s28 = sshll.u32 [#allocation5], 4
      %s29 = int_to_ptr.vmem [resolvable:$true] %s28
      %34 = dma.hbm_to_vmem [thread:$0]  %s27, 2048, %s29, [#allocation6], 128, 128, 8
    $region9: #{tpu_custom_call.1} parent=1 // pred_fallthru
      _
    // Predicated region
    $region10: #{tpu_custom_call.1} parent=1 // pred_check
      _
    $region11: #{tpu_custom_call.1} parent=1 // pred_check_branch
      %36 = sbr.rel (0) target = $region13
    $region12: #{tpu_custom_call.1} parent=1 // pred_region
      _
    $region13: #{tpu_custom_call.1} parent=1 // pred_fallthru
      _
    // Predicated region
    $region14: #{tpu_custom_call.1} parent=1 // pred_check
      _
    $region15: #{tpu_custom_call.1} parent=1 // pred_check_branch
      %38 = sbr.rel (0) target = $region17
    $region16: #{tpu_custom_call.1} parent=1 // pred_region
      %40 = dma.done [#allocation3], 32
    $region17: #{tpu_custom_call.1} parent=1 // pred_fallthru
      _
    // Predicated region
    $region18: #{tpu_custom_call.1} parent=1 // pred_check
      _
    $region19: #{tpu_custom_call.1} parent=1 // pred_check_branch
      %42 = sbr.rel (0) target = $region21
    $region20: #{tpu_custom_call.1} parent=1 // pred_region
      %44 = dma.done [#allocation6], 2048
    $region21: #{tpu_custom_call.1} parent=1 // pred_fallthru
      _
    %v45 = vld [vmem:[#allocation2] sm:$0x3]
    %v46 = vld [vmem:[#allocation5] sm:$0xff]
    %v47 = vld [vmem:[#allocation5 + $0x8] sm:$0xff]
    %v48 = vld [vmem:[#allocation5 + $0x10] sm:$0xff]
    %v49 = vld [vmem:[#allocation5 + $0x18] sm:$0xff]
    %v50 = vld [vmem:[#allocation5 + $0x20] sm:$0xff]
    %v51 = vld [vmem:[#allocation5 + $0x28] sm:$0xff]
    %v52 = vld [vmem:[#allocation5 + $0x30] sm:$0xff]
    %v53 = vld [vmem:[#allocation5 + $0x38] sm:$0xff]
    %v54 = vld [vmem:[#allocation5 + $0x40] sm:$0xff]
    %v55 = vld [vmem:[#allocation5 + $0x48] sm:$0xff]
    %v56 = vld [vmem:[#allocation5 + $0x50] sm:$0xff]
    %v57 = vld [vmem:[#allocation5 + $0x58] sm:$0xff]
    %v58 = vld [vmem:[#allocation5 + $0x60] sm:$0xff]
    %v59 = vld [vmem:[#allocation5 + $0x68] sm:$0xff]
    %v60 = vld [vmem:[#allocation5 + $0x70] sm:$0xff]
    %v61 = vld [vmem:[#allocation5 + $0x78] sm:$0xff]
    %v62 = vld [vmem:[%s2] sm:$0x1]
    %v64 = vperm.slane %v62, 0
    %66 = vmatpush.xpose.msra.mxu0 %v61
    %67 = vmatpush.xpose.msra.mxu0 %v60
    %68 = vmatpush.xpose.msra.mxu0 %v59
    %69 = vmatpush.xpose.msra.mxu0 %v58
    %70 = vmatpush.xpose.msra.mxu0 %v57
    %71 = vmatpush.xpose.msra.mxu0 %v56
    %72 = vmatpush.xpose.msra.mxu0 %v55
    %73 = vmatpush.xpose.msra.mxu0 %v54
    %74 = vmatpush.xpose.msra.mxu0 %v53
    %75 = vmatpush.xpose.msra.mxu0 %v52
    %76 = vmatpush.xpose.msra.mxu0 %v51
    %77 = vmatpush.xpose.msra.mxu0 %v50
    %78 = vmatpush.xpose.msra.mxu0 %v49
    %79 = vmatpush.xpose.msra.mxu0 %v48
    %80 = vmatpush.xpose.msra.mxu0 %v47
    %81 = vmatpush.xpose.msra.mxu0 %v46
    %82 = vmatmul.f32.gmra.mxu0 %v45
    %v83 = vpop.f32.mrf.mxu0
    %v84 = vadd.f32 %v64, %v83
    %85 = vdwg.mxu0
    %v86 = vmul.f32 %v84, 0.01
    %v87 = vmax.f32 %v84, %v86
    %88 = vst [vmem:[#allocation7] sm:$0x3] %v87
    // Predicated region
    $region22: #{tpu_custom_call.1} parent=1 // pred_check
      _
    $region23: #{tpu_custom_call.1} parent=1 // pred_check_branch
      %90 = sbr.rel (0) target = $region25
    $region24: #{tpu_custom_call.1} parent=1 // pred_region
      %92 = vsyncadd [#allocation4], 0
      %s94 = sshll.u32 [#allocation7], 4
      %s95 = int_to_ptr.vmem [resolvable:$true] %s94
      %s96 = sshll.u32 %s3, 4
      %s97 = int_to_ptr.hbm [resolvable:$true] %s96
      %99 = dma.vmem_to_hbm [thread:$0]  %s95, 32, %s97, [#allocation4]
    $region25: #{tpu_custom_call.1} parent=1 // pred_fallthru
      _
    // Predicated region
    $region26: #{tpu_custom_call.1} parent=1 // pred_check
      _
    $region27: #{tpu_custom_call.1} parent=1 // pred_check_branch
      %101 = sbr.rel (0) target = $region29
    $region28: #{tpu_custom_call.1} parent=1 // pred_region
      %103 = dma.done [#allocation4], 32
    $region29: #{tpu_custom_call.1} parent=1 // pred_fallthru
      _
    %104 = vsyncpa [#allocation3], 1
    %105 = vsyncpa [#allocation6], 1
    %106 = vsyncpa [#allocation4], 1

</llo_original>
